<compile_context>
chip_gen: v7x
topology: tpu7x:2x2x1
jax: 0.10.0
libtpu: 0.0.40
codegen_flags: <defaults>
</compile_context>

<pallas_src>
import functools

import jax
import jax.numpy as jnp
from jax import lax
from jax.experimental import pallas as pl
from jax.experimental.pallas import tpu as pltpu

LANES = 128
MAX_ROW_BLOCK = 4096   # (4096, 128) f32 = 2 MiB per stream per buffer


def _round_up(x, m):
    return ((x + m - 1) // m) * m


def _sublane_multiple(*dtypes):
    """Row-block granularity respecting sublane packing of narrow dtypes."""
    m = 8
    for d in dtypes:
        bits = jnp.dtype(d).itemsize * 8
        m = max(m, 8 * max(1, 32 // bits))
    return m


def _num_tensorcores():
    """2 TensorCores per chip on v7x (and v4/v5p megacore); 1 on v5e/v6e."""
    try:
        kind = jax.devices()[0].device_kind.lower()
    except Exception:
        return 1
    if ("v4" in kind) or ("v5p" in kind) or ("v5 p" in kind) or ("7" in kind):
        return 2
    return 1


def _focal_loss_kernel(x_ref, t_ref, out_ref, acc_ref, *,
                       alpha, gamma, n_valid, block_elems):
    c = pl.program_id(0)          # core / partial-sum index (parallel)
    i = pl.program_id(1)          # streaming step within this core (arbitrary)
    nsteps = pl.num_programs(1)

    @pl.when(i == 0)
    def _():
        acc_ref[...] = jnp.zeros_like(acc_ref)

    x = x_ref[...].astype(jnp.float32)
    t = t_ref[...].astype(jnp.float32)

    # Numerically-stable BCE with logits (matches
    # F.binary_cross_entropy_with_logits(..., reduction='none')):
    #   bce = max(x, 0) - x*t + log(1 + exp(-|x|))
    bce = jnp.maximum(x, 0.0) - x * t + jnp.log1p(jnp.exp(-jnp.abs(x)))
    # exp(-bce) is correct for soft targets; the hard-target 2-EUP variant
    # (reciprocal-based) is deliberately not used for correctness.
    pt = jnp.exp(-bce)
    one_minus_pt = 1.0 - pt

    # (1 - pt) ** gamma: integer gamma -> repeated multiply (pure VPU).
    if float(gamma).is_integer() and gamma >= 0:
        g = int(gamma)
        if g == 0:
            mod = jnp.ones_like(bce)
        else:
            mod = one_minus_pt
            for _ in range(g - 1):
                mod = mod * one_minus_pt
    else:
        mod = one_minus_pt ** gamma

    f_loss = mod * bce
    if alpha != 1.0:
        f_loss = alpha * f_loss

    rb = f_loss.shape[0]

    def fold(v):
        # (rb, 128) -> (8, 128): vreg-aligned reshape (free) + VPU adds.
        return jnp.sum(v.reshape(rb // 8, 8, LANES), axis=0)

    # Global flat offset of this block. Only blocks that straddle (or lie
    # past) n_valid need the validity mask; interior blocks are unmasked.
    offset = (c * nsteps + i) * block_elems
    is_tail = offset + block_elems > n_valid

    @pl.when(jnp.logical_not(is_tail))
    def _():
        acc_ref[...] += fold(f_loss)

    @pl.when(is_tail)
    def _():
        rid = lax.broadcasted_iota(jnp.int32, f_loss.shape, 0)
        cid = lax.broadcasted_iota(jnp.int32, f_loss.shape, 1)
        flat = offset + rid * LANES + cid
        # Select (not arithmetic zeroing) so NaN/Inf computed from garbage
        # rows of a partial/out-of-range block can never leak into the sum.
        acc_ref[...] += fold(jnp.where(flat < n_valid, f_loss, 0.0))

    # Single cross-lane reduce per core, on the final step only.
    @pl.when(i == nsteps - 1)
    def _():
        part = jnp.sum(acc_ref[...], axis=1, keepdims=True)   # (8, 1)
        part = jnp.sum(part, axis=0, keepdims=True)           # (1, 1)
        out_ref[...] = jnp.broadcast_to(part, out_ref.shape)  # (8, 128)


def focal_loss(inputs, targets, *, alpha=1.0, gamma=2.0, reduction="mean"):
    """Pallas TPU FocalLoss forward. Supports reduction='mean' and 'sum'."""
    assert inputs.shape == targets.shape
    if reduction not in ("mean", "sum"):
        # TODO(synk): reduction='none' (full per-element map) is not wired to
        # this reduced-sum kernel; only 'mean'/'sum' are implemented.
        raise NotImplementedError("only reduction in ('mean', 'sum')")

    n_valid = int(inputs.size)
    x = inputs.reshape(-1)      # keep native dtype; cast happens in-kernel
    t = targets.reshape(-1)

    # Pad only to the next multiple of 128 lanes (and only if needed); all
    # other alignment (row_block / core chunk) is handled by the in-kernel
    # iota mask on the partial final block, avoiding a full-array pad copy.
    # TODO(synk): sub-128 remainders still cost one jnp.pad copy of the flat
    # stream; a split bulk+tail path would avoid it.
    rem = n_valid % LANES
    if rem:
        x = jnp.pad(x, (0, LANES - rem))
        t = jnp.pad(t, (0, LANES - rem))
    rows = x.size // LANES
    x2 = x.reshape(rows, LANES)
    t2 = t.reshape(rows, LANES)

    ncores = _num_tensorcores()
    sub = _sublane_multiple(x.dtype, t.dtype)
    row_block = min(MAX_ROW_BLOCK, _round_up(pl.cdiv(rows, ncores), sub))
    block_elems = row_block * LANES
    blocks_total = pl.cdiv(rows, row_block)
    steps = pl.cdiv(blocks_total, ncores)
    last_block = blocks_total - 1

    kernel = functools.partial(
        _focal_loss_kernel, alpha=float(alpha), gamma=float(gamma),
        n_valid=n_valid, block_elems=block_elems)

    def in_idx(c, i):
        # Clamp so fully out-of-range blocks (possible when blocks_total is
        # not a multiple of ncores) re-read the last block; the in-kernel
        # offset mask zeroes their contribution.
        return (jnp.minimum(c * steps + i, last_block), 0)

    in_blk = pl.BlockSpec((row_block, LANES), in_idx)

    partials = pl.pallas_call(
        kernel,
        out_shape=jax.ShapeDtypeStruct((ncores, 8, LANES), jnp.float32),
        grid_spec=pltpu.PrefetchScalarGridSpec(
            num_scalar_prefetch=0,
            grid=(ncores, steps),
            in_specs=[in_blk, in_blk],
            out_specs=pl.BlockSpec((None, 8, LANES), lambda c, i: (c, 0, 0)),
            scratch_shapes=[pltpu.VMEM((8, LANES), jnp.float32)],
        ),
        compiler_params=pltpu.CompilerParams(
            dimension_semantics=("parallel", "arbitrary")),
    )(x2, t2)

    total = jnp.sum(partials[:, 0, 0])
    if reduction == "mean":
        return total / jnp.float32(n_valid)
    return total


def _reference_focal_loss(inputs, targets, alpha=1.0, gamma=2.0):
    x = inputs.astype(jnp.float32)
    t = targets.astype(jnp.float32)
    bce = jnp.maximum(x, 0.0) - x * t + jnp.log1p(jnp.exp(-jnp.abs(x)))
    pt = jnp.exp(-bce)
    return jnp.mean(alpha * (1.0 - pt) ** gamma * bce)


if __name__ == "__main__":
    key = jax.random.PRNGKey(0)
    k1, k2 = jax.random.split(key)
    # Logits and binary targets, NCHW-like shape (batch=2, ch=4, 16x16).
    shape = (2, 4, 16, 16)
    inputs = jax.random.normal(k1, shape, dtype=jnp.float32) * 2.0
    targets = (jax.random.uniform(k2, shape) > 0.5).astype(jnp.float32)

    loss = focal_loss(inputs, targets, alpha=1.0, gamma=2.0, reduction="mean")
    loss = jax.block_until_ready(loss)

    ref = _reference_focal_loss(inputs, targets)
    assert jnp.allclose(loss, ref, rtol=1e-5, atol=1e-6), (loss, ref)
    print("KERNEL_OK")
</pallas_src>

<mosaic_0001>
module attributes {stable_mosaic.version = 11 : i64} {
  func.func @_focal_loss_kernel(%arg0: i32, %arg1: i32, %arg2: memref<16x128xf32, #tpu.memory_space<vmem>>, %arg3: memref<16x128xf32, #tpu.memory_space<vmem>>, %arg4: memref<1x8x128xf32, #tpu.memory_space<vmem>>, %arg5: memref<8x128xf32, #tpu.memory_space<vmem>>) attributes {dimension_semantics = [#tpu.dimension_semantics<parallel>, #tpu.dimension_semantics<arbitrary>], iteration_bounds = array<i64: 1, 1>, scalar_prefetch = 0 : i64, scratch_operands = 1 : i64, tpu.core_type = #tpu.core_type<tc>, window_params = [{transform_indices = @transform_0, window_bounds = array<i64: 16, 128>}, {transform_indices = @transform_1, window_bounds = array<i64: 16, 128>}, {transform_indices = @transform_2, window_bounds = array<i64: 1, 8, 128>}]} {
    %c0_i32 = arith.constant 0 : i32
    %0 = arith.cmpi eq, %arg1, %c0_i32 : i32
    %1 = arith.extui %0 : i1 to i32
    %c0_i32_0 = arith.constant 0 : i32
    %2 = arith.cmpi ne, %1, %c0_i32_0 : i32
    scf.if %2 {
      %cst_13 = arith.constant 0.000000e+00 : f32
      %35 = vector.broadcast %cst_13 : f32 to vector<8x128xf32>
      %c0_14 = arith.constant 0 : index
      %c0_15 = arith.constant 0 : index
      %36 = vector.load %arg5[%c0_14, %c0_15] : memref<8x128xf32, #tpu.memory_space<vmem>>, vector<8x128xf32>
      tpu.vector_store %arg5[%c0_14, %c0_15], %35 {strides = array<i32>} : memref<8x128xf32, #tpu.memory_space<vmem>>, vector<8x128xf32>,
    } else {
    }
    %c0 = arith.constant 0 : index
    %c0_1 = arith.constant 0 : index
    %3 = vector.load %arg2[%c0, %c0_1] : memref<16x128xf32, #tpu.memory_space<vmem>>, vector<16x128xf32>
    %c0_2 = arith.constant 0 : index
    %c0_3 = arith.constant 0 : index
    %4 = vector.load %arg3[%c0_2, %c0_3] : memref<16x128xf32, #tpu.memory_space<vmem>>, vector<16x128xf32>
    %cst = arith.constant 0.000000e+00 : f32
    %5 = vector.broadcast %cst : f32 to vector<16x128xf32>
    %6 = arith.maximumf %3, %5 : vector<16x128xf32>
    %7 = arith.mulf %3, %4 : vector<16x128xf32>
    %8 = arith.subf %6, %7 : vector<16x128xf32>
    %9 = math.absf %3 : vector<16x128xf32>
    %cst_4 = arith.constant 0.000000e+00 : f32
    %10 = vector.broadcast %cst_4 : f32 to vector<16x128xf32>
    %11 = arith.subf %10, %9 : vector<16x128xf32>
    %12 = math.exp %11 : vector<16x128xf32>
    %13 = math.log1p %12 : vector<16x128xf32>
    %14 = arith.addf %8, %13 : vector<16x128xf32>
    %cst_5 = arith.constant 0.000000e+00 : f32
    %15 = vector.broadcast %cst_5 : f32 to vector<16x128xf32>
    %16 = arith.subf %15, %14 : vector<16x128xf32>
    %17 = math.exp %16 : vector<16x128xf32>
    %cst_6 = arith.constant 1.000000e+00 : f32
    %18 = vector.broadcast %cst_6 : f32 to vector<16x128xf32>
    %19 = arith.subf %18, %17 : vector<16x128xf32>
    %20 = arith.mulf %19, %19 : vector<16x128xf32>
    %21 = arith.mulf %20, %14 : vector<16x128xf32>
    %c1_i32 = arith.constant 1 : i32
    %22 = arith.muli %arg0, %c1_i32 : i32
    %23 = arith.addi %22, %arg1 : i32
    %c2048_i32 = arith.constant 2048 : i32
    %24 = arith.muli %23, %c2048_i32 : i32
    %c2048_i32_7 = arith.constant 2048 : i32
    %25 = arith.addi %24, %c2048_i32_7 : i32
    %c2048_i32_8 = arith.constant 2048 : i32
    %26 = arith.cmpi sgt, %25, %c2048_i32_8 : i32
    %true = arith.constant true
    %27 = arith.xori %26, %true : i1
    %28 = arith.extui %27 : i1 to i32
    %c0_i32_9 = arith.constant 0 : i32
    %29 = arith.cmpi ne, %28, %c0_i32_9 : i32
    scf.if %29 {
      %c0_13 = arith.constant 0 : index
      %c0_14 = arith.constant 0 : index
      %35 = vector.load %arg5[%c0_13, %c0_14] : memref<8x128xf32, #tpu.memory_space<vmem>>, vector<8x128xf32>
      %36 = vector.shape_cast %21 : vector<16x128xf32> to vector<2x8x128xf32>
      %cst_15 = arith.constant dense<0.000000e+00> : vector<8x128xf32>
      %37 = vector.multi_reduction <add>, %36, %cst_15 [0] : vector<2x8x128xf32> to vector<8x128xf32>
      %38 = arith.addf %35, %37 : vector<8x128xf32>
      %c0_16 = arith.constant 0 : index
      %c0_17 = arith.constant 0 : index
      %39 = vector.load %arg5[%c0_16, %c0_17] : memref<8x128xf32, #tpu.memory_space<vmem>>, vector<8x128xf32>
      tpu.vector_store %arg5[%c0_16, %c0_17], %38 {strides = array<i32>} : memref<8x128xf32, #tpu.memory_space<vmem>>, vector<8x128xf32>,
    } else {
    }
    %30 = arith.extui %26 : i1 to i32
    %c0_i32_10 = arith.constant 0 : i32
    %31 = arith.cmpi ne, %30, %c0_i32_10 : i32
    scf.if %31 {
      %35 = tpu.iota {dimensions = array<i32: 0>} : vector<16x128xi32>
      %36 = tpu.iota {dimensions = array<i32: 1>} : vector<16x128xi32>
      %c128_i32 = arith.constant 128 : i32
      %37 = vector.broadcast %c128_i32 : i32 to vector<16x128xi32>
      %38 = arith.muli %35, %37 : vector<16x128xi32>
      %39 = vector.broadcast %24 : i32 to vector<16x128xi32>
      %40 = arith.addi %39, %38 : vector<16x128xi32>
      %41 = arith.addi %40, %36 : vector<16x128xi32>
      %c0_13 = arith.constant 0 : index
      %c0_14 = arith.constant 0 : index
      %42 = vector.load %arg5[%c0_13, %c0_14] : memref<8x128xf32, #tpu.memory_space<vmem>>, vector<8x128xf32>
      %c2048_i32_15 = arith.constant 2048 : i32
      %43 = vector.broadcast %c2048_i32_15 : i32 to vector<16x128xi32>
      %44 = arith.cmpi slt, %41, %43 : vector<16x128xi32>
      %cst_16 = arith.constant 0.000000e+00 : f32
      %45 = vector.broadcast %cst_16 : f32 to vector<16x128xf32>
      %46 = arith.select %44, %21, %45 : vector<16x128xi1>, vector<16x128xf32>
      %47 = vector.shape_cast %46 : vector<16x128xf32> to vector<2x8x128xf32>
      %cst_17 = arith.constant dense<0.000000e+00> : vector<8x128xf32>
      %48 = vector.multi_reduction <add>, %47, %cst_17 [0] : vector<2x8x128xf32> to vector<8x128xf32>
      %49 = arith.addf %42, %48 : vector<8x128xf32>
      %c0_18 = arith.constant 0 : index
      %c0_19 = arith.constant 0 : index
      %50 = vector.load %arg5[%c0_18, %c0_19] : memref<8x128xf32, #tpu.memory_space<vmem>>, vector<8x128xf32>
      tpu.vector_store %arg5[%c0_18, %c0_19], %49 {strides = array<i32>} : memref<8x128xf32, #tpu.memory_space<vmem>>, vector<8x128xf32>,
    } else {
    }
    %c0_i32_11 = arith.constant 0 : i32
    %32 = arith.cmpi eq, %arg1, %c0_i32_11 : i32
    %33 = arith.extui %32 : i1 to i32
    %c0_i32_12 = arith.constant 0 : i32
    %34 = arith.cmpi ne, %33, %c0_i32_12 : i32
    scf.if %34 {
      %c0_13 = arith.constant 0 : index
      %c0_14 = arith.constant 0 : index
      %35 = vector.load %arg5[%c0_13, %c0_14] : memref<8x128xf32, #tpu.memory_space<vmem>>, vector<8x128xf32>
      %cst_15 = arith.constant dense<0.000000e+00> : vector<8xf32>
      %36 = vector.multi_reduction <add>, %35, %cst_15 [1] : vector<8x128xf32> to vector<8xf32>
      %37 = vector.shape_cast %36 : vector<8xf32> to vector<8x1xf32>
      %cst_16 = arith.constant dense<0.000000e+00> : vector<1xf32>
      %38 = vector.multi_reduction <add>, %37, %cst_16 [0] : vector<8x1xf32> to vector<1xf32>
      %39 = vector.shape_cast %38 : vector<1xf32> to vector<1x1xf32>
      %40 = vector.shape_cast %39 : vector<1x1xf32> to vector<1x1xf32>
      %41 = vector.broadcast %40 : vector<1x1xf32> to vector<8x128xf32>
      %c0_17 = arith.constant 0 : index
      %c0_18 = arith.constant 0 : index
      %c0_19 = arith.constant 0 : index
      %42 = vector.load %arg4[%c0_17, %c0_18, %c0_19] : memref<1x8x128xf32, #tpu.memory_space<vmem>>, vector<1x8x128xf32>
      %43 = vector.shape_cast %42 : vector<1x8x128xf32> to vector<8x128xf32>
      %44 = vector.shape_cast %41 : vector<8x128xf32> to vector<1x8x128xf32>
      tpu.vector_store %arg4[%c0_17, %c0_18, %c0_19], %44 {strides = array<i32>} : memref<1x8x128xf32, #tpu.memory_space<vmem>>, vector<1x8x128xf32>,
    } else {
    }
    return
  }
  func.func @transform_0(%arg0: i32, %arg1: i32) -> (i32, i32) {
    %c1_i32 = arith.constant 1 : i32
    %0 = arith.muli %arg0, %c1_i32 : i32
    %1 = arith.addi %0, %arg1 : i32
    %c0_i32 = arith.constant 0 : i32
    %2 = arith.minsi %1, %c0_i32 : i32
    %c0_i32_0 = arith.constant 0 : i32
    %c0_i32_1 = arith.constant 0 : i32
    return %2, %c0_i32_0 : i32, i32
  }
  func.func @transform_1(%arg0: i32, %arg1: i32) -> (i32, i32) {
    %c1_i32 = arith.constant 1 : i32
    %0 = arith.muli %arg0, %c1_i32 : i32
    %1 = arith.addi %0, %arg1 : i32
    %c0_i32 = arith.constant 0 : i32
    %2 = arith.minsi %1, %c0_i32 : i32
    %c0_i32_0 = arith.constant 0 : i32
    %c0_i32_1 = arith.constant 0 : i32
    return %2, %c0_i32_0 : i32, i32
  }
  func.func @transform_2(%arg0: i32, %arg1: i32) -> (i32, i32, i32) {
    %c0_i32 = arith.constant 0 : i32
    %c0_i32_0 = arith.constant 0 : i32
    %c0_i32_1 = arith.constant 0 : i32
    return %arg0, %c0_i32, %c0_i32_0 : i32, i32, i32
  }
}

</mosaic_0001>

<llo_original>
// kernel: tpu_custom_call.1
$region0: #{tpu_custom_call.1}
  #allocation0 [shape = 'u32[]', space=smem, size = 0x4, offset = 0x4, fixed_abs, tag = 'smem constant byte address 0x4 - core index']
  #allocation1 [shape = 'u32[144,128]{1,0:T(1,128)}', space=vmem, size = 0x12000, scoped, tag = 'internal scratch']
  #allocation2 [shape = 'f32[8,128]{1,0:T(8,128)}', space=vmem, size = 0x1000, scoped, tag = 'scratch operand']
  %s0 = inlined_call_operand.hbm [shape: f32[16,128], index: 0, kind: input, shape index: {}]
  %s1 = inlined_call_operand.hbm [shape: f32[16,128], index: 1, kind: input, shape index: {}]
  %s2 = inlined_call_operand.hbm [shape: f32[1,8,128], index: 2, kind: output, shape index: {}]
  %s3 = sld [smem:[#allocation0]]
  $region42: #{tpu_custom_call.1} parent=0
    _
  %s5 = ssub.s32 1, %s3
  %s6 = scalar_select 0, %s5, %s3
  $region1: #{tpu_custom_call.1} parent=0
    #allocation3 [shape = 'u8[8192]{0}', space=vmem, size = 0x2000, scoped, tag = 'input window, operand 0, single buffered']
    #allocation4 [shape = 's32[1]{0}', space=sflag, size = 0x4, scoped, tag = 'scoped memory for tpu_custom_call.1']
    #allocation5 [shape = 's32[1]{0}', space=sflag, size = 0x4, scoped, tag = 'scoped memory for tpu_custom_call.1']
    #allocation6 [shape = 'u8[8192]{0}', space=vmem, size = 0x2000, scoped, tag = 'input window, operand 1, single buffered']
    #allocation7 [shape = 's32[1]{0}', space=sflag, size = 0x4, scoped, tag = 'scoped memory for tpu_custom_call.1']
    #allocation8 [shape = 'u8[4096]{0}', space=vmem, size = 0x1000, scoped, tag = 'output window, operand 0, single buffered']
    %7 = vsyncpa [#allocation4], 0
    %8 = vsyncpa [#allocation7], 0
    %9 = vsyncpa [#allocation5], 0
    // Predicated region
    $region2: #{tpu_custom_call.1} parent=1 // pred_check
      _
    $region3: #{tpu_custom_call.1} parent=1 // pred_check_branch
      %11 = sbr.rel (0) target = $region5
    $region4: #{tpu_custom_call.1} parent=1 // pred_region
      %s12 = sadd.s32 0, 0
      %p13 = scmp.lt.s32.totalorder %s12, 0
      %s14 = scalar_select %p13, %s12, 0
      %s15 = smul.u32 2, %s14
      %s17 = ssub.s32 256, 256
      %18 = vsyncadd [#allocation4], %s17
      %s19 = smul.addr %s15, 128
      %s20 = scalar_lea.hbm %s0, %s19
      %s21 = sshll.u32 [#allocation3], 4
      %s22 = int_to_ptr.vmem [resolvable:$true] %s21
      %27 = dma.hbm_to_vmem [thread:$0]  %s20, 256, %s22, [#allocation4], 128, 128, 8
    $region5: #{tpu_custom_call.1} parent=1 // pred_fallthru
      _
    // Predicated region
    $region6: #{tpu_custom_call.1} parent=1 // pred_check
      _
    $region7: #{tpu_custom_call.1} parent=1 // pred_check_branch
      %29 = sbr.rel (0) target = $region9
    $region8: #{tpu_custom_call.1} parent=1 // pred_region
      %s30 = sadd.s32 0, 0
      %p31 = scmp.lt.s32.totalorder %s30, 0
      %s32 = scalar_select %p31, %s30, 0
      %s33 = smul.u32 2, %s32
      %s35 = ssub.s32 256, 256
      %36 = vsyncadd [#allocation7], %s35
      %s37 = smul.addr %s33, 128
      %s38 = scalar_lea.hbm %s1, %s37
      %s39 = sshll.u32 [#allocation6], 4
      %s40 = int_to_ptr.vmem [resolvable:$true] %s39
      %45 = dma.hbm_to_vmem [thread:$0]  %s38, 256, %s40, [#allocation7], 128, 128, 8
    $region9: #{tpu_custom_call.1} parent=1 // pred_fallthru
      _
    // Predicated region
    $region10: #{tpu_custom_call.1} parent=1 // pred_check
      _
    $region11: #{tpu_custom_call.1} parent=1 // pred_check_branch
      %47 = sbr.rel (0) target = $region13
    $region12: #{tpu_custom_call.1} parent=1 // pred_region
      %48 = dma.done [#allocation4], 256
    $region13: #{tpu_custom_call.1} parent=1 // pred_fallthru
      _
    // Predicated region
    $region14: #{tpu_custom_call.1} parent=1 // pred_check
      _
    $region15: #{tpu_custom_call.1} parent=1 // pred_check_branch
      %50 = sbr.rel (0) target = $region17
    $region16: #{tpu_custom_call.1} parent=1 // pred_region
      %51 = dma.done [#allocation7], 256
    $region17: #{tpu_custom_call.1} parent=1 // pred_fallthru
      _
    %s52 = sadd.s32 0, 0
    %p53 = scmp.lt.s32.totalorder %s52, 0
    %s54 = scalar_select %p53, %s52, 0
    %s55 = smul.u32 2, %s54
    %s56 = sadd.s32 0, 0
    %p57 = scmp.lt.s32.totalorder %s56, 0
    %s58 = scalar_select %p57, %s56, 0
    %s59 = smul.u32 2, %s58
    %p60 = scmp.eq.s32.totalorder 0, 0
    // Predicated region
    $region18: #{tpu_custom_call.1} parent=1 // pred_check
      %p61 = pneg %p60
    $region19: #{tpu_custom_call.1} parent=1 // pred_check_branch
      %63 = sbr.rel (%p61) target = $region21
    $region20: #{tpu_custom_call.1} parent=1 // pred_region
      %64 = vst [vmem:[#allocation2] sm:$0xff] 0.0
    $region21: #{tpu_custom_call.1} parent=1 // pred_fallthru
      _
    %v65 = vld [vmem:[#allocation3] sm:$0xff]
    %v66 = vld [vmem:[#allocation3 + $0x8] sm:$0xff]
    %v67 = vld [vmem:[#allocation6] sm:$0xff]
    %v68 = vld [vmem:[#allocation6 + $0x8] sm:$0xff]
    %v69 = vmax.f32 %v65, 0.0
    %v70 = vmax.f32 %v66, 0.0
    %v71 = vmul.f32 %v65, %v67
    %v72 = vmul.f32 %v66, %v68
    %v73 = vsub.f32 %v69, %v71
    %v74 = vsub.f32 %v70, %v72
    %v75 = vand.u32 2147483647, %v65
    %v76 = vand.u32 2147483647, %v66
    %v77 = vsub.f32 0.0, %v75
    %v78 = vsub.f32 0.0, %v76
    %v79 = vmul.f32 %v77, 1.442695
    %v80 = vpow.pop %v79
    %v81 = vmul.f32 %v78, 1.442695
    %v82 = vpow.pop %v81
    %v83 = vadd.f32 %v80, 1.0
    %v84 = vlog2.pop %v83
    %v85 = vmul.f32 %v84, 0.6931472
    %v86 = vmul.f32 -0.5, %v80
    %v87 = vadd.f32 %v86, 1.0
    %v88 = vmul.f32 %v87, %v80
    %v89 = vand.u32 2147483647, %v80
    %vm90 = vcmp.lt.f32.partialorder %v89, 0.0004427343
    %v91 = vsel %vm90, %v88, %v85
    %v92 = vadd.f32 %v82, 1.0
    %v93 = vlog2.pop %v92
    %v94 = vmul.f32 %v93, 0.6931472
    %v95 = vmul.f32 -0.5, %v82
    %v96 = vadd.f32 %v95, 1.0
    %v97 = vmul.f32 %v96, %v82
    %v98 = vand.u32 2147483647, %v82
    %vm99 = vcmp.lt.f32.partialorder %v98, 0.0004427343
    %v100 = vsel %vm99, %v97, %v94
    %v101 = vadd.f32 %v73, %v91
    %v102 = vadd.f32 %v74, %v100
    %v103 = vsub.f32 0.0, %v101
    %v104 = vsub.f32 0.0, %v102
    %v105 = vmul.f32 %v103, 1.442695
    %v106 = vpow.pop %v105
    %v107 = vmul.f32 %v104, 1.442695
    %v108 = vpow.pop %v107
    %v109 = vsub.f32 1.0, %v106
    %v110 = vsub.f32 1.0, %v108
    %v111 = vmul.f32 %v109, %v109
    %v112 = vmul.f32 %v110, %v110
    %v113 = vmul.f32 %v111, %v101
    %v114 = vmul.f32 %v112, %v102
    %s115 = sadd.s32 0, 0
    %s116 = smul.u32 %s115, 2048
    %s117 = sadd.s32 %s116, 2048
    %p118 = scmp.gt.s32.totalorder %s117, 2048
    %p119 = scmp.le.s32.totalorder %s117, 2048
    // Predicated region
    $region22: #{tpu_custom_call.1} parent=1 // pred_check
      %p120 = pneg %p119
    $region23: #{tpu_custom_call.1} parent=1 // pred_check_branch
      %122 = sbr.rel (%p120) target = $region25
    $region24: #{tpu_custom_call.1} parent=1 // pred_region
      %v123 = vld [vmem:[#allocation2] sm:$0xff]
      %v124 = vadd.f32 %v113, %v114
      %v125 = vadd.f32 %v123, %v124
      %126 = vst [vmem:[#allocation2] sm:$0xff] %v125
    $region25: #{tpu_custom_call.1} parent=1 // pred_fallthru
      _
    // Predicated region
    $region26: #{tpu_custom_call.1} parent=1 // pred_check
      %p127 = pneg %p118
    $region27: #{tpu_custom_call.1} parent=1 // pred_check_branch
      %129 = sbr.rel (%p127) target = $region29
    $region28: #{tpu_custom_call.1} parent=1 // pred_region
      %v130 = vlaneseq
      %v131 = vshrl.u32 %v130, 7
      %v132 = vadd.s32 %v131, 8
      %v133 = vlaneseq
      %v134 = vand.u32 %v133, 127
      %v135 = vmul.u32 %v131, 128
      %v136 = vmul.u32 %v132, 128
      %v137 = vstv %s116
      %v138 = vadd.s32 %v137, %v135
      %v139 = vadd.s32 %v137, %v136
      %v140 = vadd.s32 %v138, %v134
      %v141 = vadd.s32 %v139, %v134
      %v142 = vld [vmem:[#allocation2] sm:$0xff]
      %vm143 = vcmp.lt.s32.totalorder %v140, 2048
      %vm144 = vcmp.lt.s32.totalorder %v141, 2048
      %v145 = vsel %vm143, %v113, 0.0
      %v146 = vsel %vm144, %v114, 0.0
      %v147 = vadd.f32 %v145, %v146
      %v148 = vadd.f32 %v142, %v147
      %149 = vst [vmem:[#allocation2] sm:$0xff] %v148
    $region29: #{tpu_custom_call.1} parent=1 // pred_fallthru
      _
    // Predicated region
    $region30: #{tpu_custom_call.1} parent=1 // pred_check
      %p150 = pneg %p60
    $region31: #{tpu_custom_call.1} parent=1 // pred_check_branch
      %152 = sbr.rel (%p150) target = $region33
    $region32: #{tpu_custom_call.1} parent=1 // pred_region
      %v153 = vld [vmem:[#allocation2] sm:$0xff]
      %154 = vadd.xlane.f32.xlu0 %v153
      %v155 = vpop.xlane.xlu0 %154
      %v156 = vrot.slane %v155, 4
      %v157 = vadd.f32 %v155, %v156
      %v158 = vrot.slane %v157, 2
      %v159 = vadd.f32 %v157, %v158
      %v160 = vrot.slane %v159, 1
      %v161 = vadd.f32 %v159, %v160
      %162 = vst [vmem:[#allocation8] sm:$0xff] %v161
    $region33: #{tpu_custom_call.1} parent=1 // pred_fallthru
      _
    // Predicated region
    $region34: #{tpu_custom_call.1} parent=1 // pred_check
      _
    $region35: #{tpu_custom_call.1} parent=1 // pred_check_branch
      %164 = sbr.rel (0) target = $region37
    $region36: #{tpu_custom_call.1} parent=1 // pred_region
      %s166 = ssub.s32 128, 128
      %167 = vsyncadd [#allocation5], %s166
      %s169 = sshll.u32 [#allocation8], 4
      %s170 = int_to_ptr.vmem [resolvable:$true] %s169
      %172 = dma.vmem_to_hbm [thread:$0]  %s170, 128, %s2, [#allocation5]
    $region37: #{tpu_custom_call.1} parent=1 // pred_fallthru
      _
    // Predicated region
    $region38: #{tpu_custom_call.1} parent=1 // pred_check
      _
    $region39: #{tpu_custom_call.1} parent=1 // pred_check_branch
      %174 = sbr.rel (0) target = $region41
    $region40: #{tpu_custom_call.1} parent=1 // pred_region
      %175 = dma.done [#allocation5], 128
    $region41: #{tpu_custom_call.1} parent=1 // pred_fallthru
      _
    %176 = vsyncpa [#allocation4], 1
    %177 = vsyncpa [#allocation7], 1
    %178 = vsyncpa [#allocation5], 1

</llo_original>
